<compile_context>
chip_gen: v6e
topology: v6e:2x2x1
jax: 0.10.0
libtpu: 0.0.40
codegen_flags: <defaults>
</compile_context>

<pallas_src>
import jax
import jax.numpy as jnp
import numpy as np
from jax.experimental import pallas as pl
from jax.experimental.pallas import tpu as pltpu

# ---- synthetic hparams --------------------------------------------------
ENCODER_HIDDEN = 32            # hp.encoder_hidden
FILTER_SIZE = 32               # hp.variance_predictor_filter_size
KERNEL_SIZE = 3                # hp.variance_predictor_kernel_size
PAD1 = (KERNEL_SIZE - 1) // 2  # conv1d_1 padding
PAD2 = 1                       # conv1d_2 padding (hard-coded 1 in the module)
LN_EPS = 1e-5


def _layer_norm(h, gamma, beta):
    mu = jnp.mean(h, axis=-1, keepdims=True)
    var = jnp.mean((h - mu) * (h - mu), axis=-1, keepdims=True)
    return (h - mu) * jax.lax.rsqrt(var + LN_EPS) * gamma + beta


def variance_predictor_kernel(
    x_ref,       # (BB, T, H)          f32 encoder output block
    w1_ref,      # (K*H, F)            bf16 conv1d_1 weight, taps folded into rows
    b1_ref,      # (1, F)              f32
    g1_ref,      # (1, F)              f32 layer_norm_1 gamma
    be1_ref,     # (1, F)              f32 layer_norm_1 beta
    w2_ref,      # (K*F, F)            bf16 conv1d_2 weight, taps folded into rows
    b2_ref,      # (1, F)
    g2_ref,      # (1, F)
    be2_ref,     # (1, F)
    wl_ref,      # (1, F)              f32 linear weight as a row (for VPU reduce)
    bl_ref,      # (1, 1)              f32 linear bias
    mask_ref,    # (BB, T)             f32, 1.0 where masked
    out_ref,     # (BB, T)             f32, lane-dense output
    xpad_s,      # (BB, T+2*PAD1, H)   f32 scratch: zero-padded input staging
    im1_s,       # (BB*T, K*H)         f32 scratch: im2col for conv1d_1
    h1pad_s,     # (BB, T+2*PAD2, F)   f32 scratch: zero-padded h1 staging
    im2_s,       # (BB*T, K*F)         f32 scratch: im2col for conv1d_2
):
    BB, T, H = x_ref.shape
    F = w1_ref.shape[1]
    K = w1_ref.shape[0] // H

    # ---- stage input with zero time-padding (no host-side jnp.pad) -------
    zx = jnp.zeros((BB, PAD1, H), jnp.float32)
    xpad_s[:, pl.ds(0, PAD1), :] = zx
    xpad_s[:, pl.ds(PAD1 + T, PAD1), :] = zx
    xpad_s[:, pl.ds(PAD1, T), :] = x_ref[...]

    # ---- conv1d_1: fold the K taps into one (BB*T, K*H) x (K*H, F) dot ----
    for b in range(BB):
        for k in range(K):
            im1_s[pl.ds(b * T, T), pl.ds(k * H, H)] = xpad_s[b, pl.ds(k, T), :]
    a1 = jnp.dot(im1_s[...].astype(jnp.bfloat16), w1_ref[...],
                 preferred_element_type=jnp.float32)          # (BB*T, F) f32
    h1 = _layer_norm(jnp.maximum(a1 + b1_ref[...], 0.0),
                     g1_ref[...], be1_ref[...])
    # dropout_1: identity at inference

    # ---- conv1d_2: same im2col trick on h1 --------------------------------
    zh = jnp.zeros((BB, PAD2, F), jnp.float32)
    h1pad_s[:, pl.ds(0, PAD2), :] = zh
    h1pad_s[:, pl.ds(PAD2 + T, PAD2), :] = zh
    for b in range(BB):
        h1pad_s[b, pl.ds(PAD2, T), :] = h1[b * T:(b + 1) * T, :]
    for b in range(BB):
        for k in range(K):
            im2_s[pl.ds(b * T, T), pl.ds(k * F, F)] = h1pad_s[b, pl.ds(k, T), :]
    a2 = jnp.dot(im2_s[...].astype(jnp.bfloat16), w2_ref[...],
                 preferred_element_type=jnp.float32)          # (BB*T, F) f32
    h2 = _layer_norm(jnp.maximum(a2 + b2_ref[...], 0.0),
                     g2_ref[...], be2_ref[...])
    # dropout_2: identity at inference

    # ---- linear to one scalar per frame: VPU multiply + lane reduction ----
    o = jnp.sum(h2.reshape(BB, T, F) * wl_ref[...], axis=-1) + bl_ref[...]
    # masked_fill(mask, 0.0) and lane-dense (BB, T) store
    out_ref[...] = jnp.where(mask_ref[...] != 0.0, 0.0, o).astype(out_ref.dtype)


def variance_predictor(x, mask, params, *, batch_tile=None):
    """x: (B, T, H) float32; mask: (B, T) bool; returns (B, T) float32."""
    B, T, H = x.shape
    K, _, F = params["w1"].shape

    # The module only keeps the time length when the convs are 'same' padded
    # (K odd, conv2's hard-coded padding == (K-1)//2).  Guard it explicitly.
    assert K % 2 == 1 and 2 * PAD1 == K - 1 and 2 * PAD2 == K - 1, (
        "VariancePredictor shapes require kernel_size=3 style 'same' padding")

    if batch_tile is None:
        # Aim for a few hundred matmul rows per grid step (largest divisor of B
        # not exceeding the cap) so per-step pipeline overhead is amortized.
        cap = max(1, 512 // max(T, 1))
        batch_tile = 1
        for d in range(1, B + 1):
            if B % d == 0 and d <= cap:
                batch_tile = d
    BB = batch_tile
    assert B % BB == 0

    # Fold the K taps into the contraction dimension; bf16 weights for the MXU.
    w1f = params["w1"].reshape(K * H, F).astype(jnp.bfloat16)
    w2f = params["w2"].reshape(K * F, F).astype(jnp.bfloat16)
    wl_row = params["wl"].reshape(1, F)          # (F, 1) -> (1, F) row
    mask_f = mask.astype(jnp.float32)            # lane-dense (B, T)

    const = lambda shp: pl.BlockSpec(shp, lambda g: (0,) * len(shp))

    out = pl.pallas_call(
        variance_predictor_kernel,
        out_shape=jax.ShapeDtypeStruct((B, T), jnp.float32),
        grid=(B // BB,),
        in_specs=[
            pl.BlockSpec((BB, T, H), lambda g: (g, 0, 0)),   # x
            const((K * H, F)),                               # w1 (taps folded)
            const((1, F)), const((1, F)), const((1, F)),     # b1, gamma1, beta1
            const((K * F, F)),                               # w2 (taps folded)
            const((1, F)), const((1, F)), const((1, F)),     # b2, gamma2, beta2
            const((1, F)),                                    # wl row
            const((1, 1)),                                    # bl
            pl.BlockSpec((BB, T), lambda g: (g, 0)),          # mask (lane-dense)
        ],
        out_specs=pl.BlockSpec((BB, T), lambda g: (g, 0)),    # lane-dense output
        scratch_shapes=[
            pltpu.VMEM((BB, T + 2 * PAD1, H), jnp.float32),   # padded x staging
            pltpu.VMEM((BB * T, K * H), jnp.float32),         # im2col conv1
            pltpu.VMEM((BB, T + 2 * PAD2, F), jnp.float32),   # padded h1 staging
            pltpu.VMEM((BB * T, K * F), jnp.float32),         # im2col conv2
        ],
        compiler_params=pltpu.CompilerParams(
            dimension_semantics=("parallel",)),
    )(
        x, w1f, params["b1"], params["g1"], params["be1"],
        w2f, params["b2"], params["g2"], params["be2"],
        wl_row, params["bl"], mask_f,
    )
    return out


def make_params(key):
    ks = jax.random.split(key, 6)
    K, H, F = KERNEL_SIZE, ENCODER_HIDDEN, FILTER_SIZE
    s1 = 1.0 / np.sqrt(H * K)
    s2 = 1.0 / np.sqrt(F * K)
    sl = 1.0 / np.sqrt(F)
    return {
        "w1": jax.random.normal(ks[0], (K, H, F), jnp.float32) * s1,
        "b1": jax.random.normal(ks[1], (1, F), jnp.float32) * s1,
        "g1": jnp.ones((1, F), jnp.float32),
        "be1": jnp.zeros((1, F), jnp.float32),
        "w2": jax.random.normal(ks[2], (K, F, F), jnp.float32) * s2,
        "b2": jax.random.normal(ks[3], (1, F), jnp.float32) * s2,
        "g2": jnp.ones((1, F), jnp.float32),
        "be2": jnp.zeros((1, F), jnp.float32),
        "wl": jax.random.normal(ks[4], (F, 1), jnp.float32) * sl,
        "bl": jax.random.normal(ks[5], (1, 1), jnp.float32) * sl,
    }


def reference_forward(x, mask, p):
    """Pure-JAX reference of the PyTorch forward (eval mode).

    Conv operands are rounded to bf16 with f32 accumulation to mirror the
    kernel's mixed-precision policy; LayerNorm, biases and the final linear
    projection stay in f32.
    """
    def conv1d(h, w, b, pad):
        K = w.shape[0]
        hp = jnp.pad(h, ((0, 0), (pad, pad), (0, 0))).astype(jnp.bfloat16)
        wb = w.astype(jnp.bfloat16)
        T_out = h.shape[1] + 2 * pad - (K - 1)
        acc = sum(jnp.einsum("btc,cf->btf", hp[:, k:k + T_out, :], wb[k],
                             preferred_element_type=jnp.float32)
                  for k in range(K))
        return acc + b

    h = conv1d(x, p["w1"], p["b1"], PAD1)
    h = _layer_norm(jnp.maximum(h, 0.0), p["g1"], p["be1"])
    h = conv1d(h, p["w2"], p["b2"], PAD2)
    h = _layer_norm(jnp.maximum(h, 0.0), p["g2"], p["be2"])
    o = (h @ p["wl"] + p["bl"])[..., 0]
    return jnp.where(mask, 0.0, o)


if __name__ == "__main__":
    key = jax.random.PRNGKey(0)
    kx, kp, km = jax.random.split(key, 3)

    B, T = 2, 8
    x = jax.random.normal(kx, (B, T, ENCODER_HIDDEN), jnp.float32)
    # mask: True for padded frames (e.g. tail of each sequence)
    lengths = jnp.array([8, 5], dtype=jnp.int32)
    mask = jnp.arange(T)[None, :] >= lengths[:, None]    # (B, T) bool

    params = make_params(kp)

    out = variance_predictor(x, mask, params)
    out = jax.block_until_ready(out)

    ref = reference_forward(x, mask, params)
    assert out.shape == (B, T)
    np.testing.assert_allclose(np.asarray(out), np.asarray(ref),
                               rtol=2e-2, atol=2e-3)
    print("KERNEL_OK")
</pallas_src>

<mosaic_0001>
module attributes {stable_mosaic.version = 11 : i64} {
  func.func @variance_predictor_kernel(%arg0: i32, %arg1: memref<2x8x32xf32, #tpu.memory_space<vmem>>, %arg2: memref<96x32xbf16, #tpu.memory_space<vmem>>, %arg3: memref<1x32xf32, #tpu.memory_space<vmem>>, %arg4: memref<1x32xf32, #tpu.memory_space<vmem>>, %arg5: memref<1x32xf32, #tpu.memory_space<vmem>>, %arg6: memref<96x32xbf16, #tpu.memory_space<vmem>>, %arg7: memref<1x32xf32, #tpu.memory_space<vmem>>, %arg8: memref<1x32xf32, #tpu.memory_space<vmem>>, %arg9: memref<1x32xf32, #tpu.memory_space<vmem>>, %arg10: memref<1x32xf32, #tpu.memory_space<vmem>>, %arg11: memref<1x1xf32, #tpu.memory_space<vmem>>, %arg12: memref<2x8xf32, #tpu.memory_space<vmem>>, %arg13: memref<2x8xf32, #tpu.memory_space<vmem>>, %arg14: memref<2x10x32xf32, #tpu.memory_space<vmem>>, %arg15: memref<16x96xf32, #tpu.memory_space<vmem>>, %arg16: memref<2x10x32xf32, #tpu.memory_space<vmem>>, %arg17: memref<16x96xf32, #tpu.memory_space<vmem>>) attributes {dimension_semantics = [#tpu.dimension_semantics<parallel>], iteration_bounds = array<i64: 1>, scalar_prefetch = 0 : i64, scratch_operands = 4 : i64, tpu.core_type = #tpu.core_type<tc>, window_params = [{transform_indices = @transform_0, window_bounds = array<i64: 2, 8, 32>}, {pipeline_mode = #tpu.pipeline_mode<synchronous>, transform_indices = @transform_1, window_bounds = array<i64: 96, 32>}, {pipeline_mode = #tpu.pipeline_mode<synchronous>, transform_indices = @transform_2, window_bounds = array<i64: 1, 32>}, {pipeline_mode = #tpu.pipeline_mode<synchronous>, transform_indices = @transform_3, window_bounds = array<i64: 1, 32>}, {pipeline_mode = #tpu.pipeline_mode<synchronous>, transform_indices = @transform_4, window_bounds = array<i64: 1, 32>}, {pipeline_mode = #tpu.pipeline_mode<synchronous>, transform_indices = @transform_5, window_bounds = array<i64: 96, 32>}, {pipeline_mode = #tpu.pipeline_mode<synchronous>, transform_indices = @transform_6, window_bounds = array<i64: 1, 32>}, {pipeline_mode = #tpu.pipeline_mode<synchronous>, transform_indices = @transform_7, window_bounds = array<i64: 1, 32>}, {pipeline_mode = #tpu.pipeline_mode<synchronous>, transform_indices = @transform_8, window_bounds = array<i64: 1, 32>}, {pipeline_mode = #tpu.pipeline_mode<synchronous>, transform_indices = @transform_9, window_bounds = array<i64: 1, 32>}, {pipeline_mode = #tpu.pipeline_mode<synchronous>, transform_indices = @transform_10, window_bounds = array<i64: 1, 1>}, {transform_indices = @transform_11, window_bounds = array<i64: 2, 8>}, {transform_indices = @transform_12, window_bounds = array<i64: 2, 8>}]} {
    %cst = arith.constant 0.000000e+00 : f32
    %0 = vector.broadcast %cst : f32 to vector<2x1x32xf32>
    %c0 = arith.constant 0 : index
    %c0_0 = arith.constant 0 : index
    %c0_1 = arith.constant 0 : index
    %1 = vector.load %arg14[%c0, %c0_0, %c0_1] : memref<2x10x32xf32, #tpu.memory_space<vmem>>, vector<2x1x32xf32>
    tpu.vector_store %arg14[%c0, %c0_0, %c0_1], %0 {strides = array<i32>} : memref<2x10x32xf32, #tpu.memory_space<vmem>>, vector<2x1x32xf32>,
    %c0_2 = arith.constant 0 : index
    %c9 = arith.constant 9 : index
    %c0_3 = arith.constant 0 : index
    %2 = vector.load %arg14[%c0_2, %c9, %c0_3] : memref<2x10x32xf32, #tpu.memory_space<vmem>>, vector<2x1x32xf32>
    tpu.vector_store %arg14[%c0_2, %c9, %c0_3], %0 {strides = array<i32>} : memref<2x10x32xf32, #tpu.memory_space<vmem>>, vector<2x1x32xf32>,
    %c0_4 = arith.constant 0 : index
    %c0_5 = arith.constant 0 : index
    %c0_6 = arith.constant 0 : index
    %3 = vector.load %arg1[%c0_4, %c0_5, %c0_6] : memref<2x8x32xf32, #tpu.memory_space<vmem>>, vector<2x8x32xf32>
    %c0_7 = arith.constant 0 : index
    %c1 = arith.constant 1 : index
    %c0_8 = arith.constant 0 : index
    %4 = vector.load %arg14[%c0_7, %c1, %c0_8] : memref<2x10x32xf32, #tpu.memory_space<vmem>>, vector<2x8x32xf32>
    tpu.vector_store %arg14[%c0_7, %c1, %c0_8], %3 {strides = array<i32>} : memref<2x10x32xf32, #tpu.memory_space<vmem>>, vector<2x8x32xf32>,
    %c0_9 = arith.constant 0 : index
    %c0_10 = arith.constant 0 : index
    %c0_11 = arith.constant 0 : index
    %5 = vector.load %arg14[%c0_9, %c0_10, %c0_11] : memref<2x10x32xf32, #tpu.memory_space<vmem>>, vector<1x8x32xf32>
    %6 = vector.shape_cast %5 : vector<1x8x32xf32> to vector<8x32xf32>
    %c0_12 = arith.constant 0 : index
    %c0_13 = arith.constant 0 : index
    %7 = vector.load %arg15[%c0_12, %c0_13] : memref<16x96xf32, #tpu.memory_space<vmem>>, vector<8x32xf32>
    tpu.vector_store %arg15[%c0_12, %c0_13], %6 {strides = array<i32>} : memref<16x96xf32, #tpu.memory_space<vmem>>, vector<8x32xf32>,
    %c0_14 = arith.constant 0 : index
    %c1_15 = arith.constant 1 : index
    %c0_16 = arith.constant 0 : index
    %8 = vector.load %arg14[%c0_14, %c1_15, %c0_16] : memref<2x10x32xf32, #tpu.memory_space<vmem>>, vector<1x8x32xf32>
    %9 = vector.shape_cast %8 : vector<1x8x32xf32> to vector<8x32xf32>
    %c0_17 = arith.constant 0 : index
    %c32 = arith.constant 32 : index
    %10 = vector.load %arg15[%c0_17, %c32] : memref<16x96xf32, #tpu.memory_space<vmem>>, vector<8x32xf32>
    tpu.vector_store %arg15[%c0_17, %c32], %9 {strides = array<i32>} : memref<16x96xf32, #tpu.memory_space<vmem>>, vector<8x32xf32>,
    %c0_18 = arith.constant 0 : index
    %c2 = arith.constant 2 : index
    %c0_19 = arith.constant 0 : index
    %11 = vector.load %arg14[%c0_18, %c2, %c0_19] : memref<2x10x32xf32, #tpu.memory_space<vmem>>, vector<1x8x32xf32>
    %12 = vector.shape_cast %11 : vector<1x8x32xf32> to vector<8x32xf32>
    %c0_20 = arith.constant 0 : index
    %c64 = arith.constant 64 : index
    %13 = vector.load %arg15[%c0_20, %c64] : memref<16x96xf32, #tpu.memory_space<vmem>>, vector<8x32xf32>
    tpu.vector_store %arg15[%c0_20, %c64], %12 {strides = array<i32>} : memref<16x96xf32, #tpu.memory_space<vmem>>, vector<8x32xf32>,
    %c1_21 = arith.constant 1 : index
    %c0_22 = arith.constant 0 : index
    %c0_23 = arith.constant 0 : index
    %14 = vector.load %arg14[%c1_21, %c0_22, %c0_23] : memref<2x10x32xf32, #tpu.memory_space<vmem>>, vector<1x8x32xf32>
    %15 = vector.shape_cast %14 : vector<1x8x32xf32> to vector<8x32xf32>
    %c8 = arith.constant 8 : index
    %c0_24 = arith.constant 0 : index
    %16 = vector.load %arg15[%c8, %c0_24] : memref<16x96xf32, #tpu.memory_space<vmem>>, vector<8x32xf32>
    tpu.vector_store %arg15[%c8, %c0_24], %15 {strides = array<i32>} : memref<16x96xf32, #tpu.memory_space<vmem>>, vector<8x32xf32>,
    %c1_25 = arith.constant 1 : index
    %c1_26 = arith.constant 1 : index
    %c0_27 = arith.constant 0 : index
    %17 = vector.load %arg14[%c1_25, %c1_26, %c0_27] : memref<2x10x32xf32, #tpu.memory_space<vmem>>, vector<1x8x32xf32>
    %18 = vector.shape_cast %17 : vector<1x8x32xf32> to vector<8x32xf32>
    %c8_28 = arith.constant 8 : index
    %c32_29 = arith.constant 32 : index
    %19 = vector.load %arg15[%c8_28, %c32_29] : memref<16x96xf32, #tpu.memory_space<vmem>>, vector<8x32xf32>
    tpu.vector_store %arg15[%c8_28, %c32_29], %18 {strides = array<i32>} : memref<16x96xf32, #tpu.memory_space<vmem>>, vector<8x32xf32>,
    %c1_30 = arith.constant 1 : index
    %c2_31 = arith.constant 2 : index
    %c0_32 = arith.constant 0 : index
    %20 = vector.load %arg14[%c1_30, %c2_31, %c0_32] : memref<2x10x32xf32, #tpu.memory_space<vmem>>, vector<1x8x32xf32>
    %21 = vector.shape_cast %20 : vector<1x8x32xf32> to vector<8x32xf32>
    %c8_33 = arith.constant 8 : index
    %c64_34 = arith.constant 64 : index
    %22 = vector.load %arg15[%c8_33, %c64_34] : memref<16x96xf32, #tpu.memory_space<vmem>>, vector<8x32xf32>
    tpu.vector_store %arg15[%c8_33, %c64_34], %21 {strides = array<i32>} : memref<16x96xf32, #tpu.memory_space<vmem>>, vector<8x32xf32>,
    %c0_35 = arith.constant 0 : index
    %c0_36 = arith.constant 0 : index
    %23 = vector.load %arg15[%c0_35, %c0_36] : memref<16x96xf32, #tpu.memory_space<vmem>>, vector<16x96xf32>
    %24 = arith.truncf %23 : vector<16x96xf32> to vector<16x96xbf16>
    %c0_37 = arith.constant 0 : index
    %c0_38 = arith.constant 0 : index
    %25 = vector.load %arg2[%c0_37, %c0_38] : memref<96x32xbf16, #tpu.memory_space<vmem>>, vector<96x32xbf16>
    %cst_39 = arith.constant dense<0.000000e+00> : vector<16x32xf32>
    %26 = tpu.matmul %24, %25, %cst_39 {dimension_numbers = #tpu.dot_dimension_numbers<[1], [0], [0], [1], [0, 0, 1, 1], [], []>} : vector<16x96xbf16>, vector<96x32xbf16>, vector<16x32xf32> -> vector<16x32xf32>
    %c0_40 = arith.constant 0 : index
    %c0_41 = arith.constant 0 : index
    %27 = vector.load %arg3[%c0_40, %c0_41] : memref<1x32xf32, #tpu.memory_space<vmem>>, vector<1x32xf32>
    %28 = vector.broadcast %27 : vector<1x32xf32> to vector<16x32xf32>
    %29 = arith.addf %26, %28 : vector<16x32xf32>
    %cst_42 = arith.constant 0.000000e+00 : f32
    %30 = vector.broadcast %cst_42 : f32 to vector<16x32xf32>
    %31 = arith.maximumf %29, %30 : vector<16x32xf32>
    %c0_43 = arith.constant 0 : index
    %c0_44 = arith.constant 0 : index
    %32 = vector.load %arg4[%c0_43, %c0_44] : memref<1x32xf32, #tpu.memory_space<vmem>>, vector<1x32xf32>
    %c0_45 = arith.constant 0 : index
    %c0_46 = arith.constant 0 : index
    %33 = vector.load %arg5[%c0_45, %c0_46] : memref<1x32xf32, #tpu.memory_space<vmem>>, vector<1x32xf32>
    %cst_47 = arith.constant dense<0.000000e+00> : vector<16xf32>
    %34 = vector.multi_reduction <add>, %31, %cst_47 [1] : vector<16x32xf32> to vector<16xf32>
    %35 = vector.shape_cast %34 : vector<16xf32> to vector<16x1xf32>
    %cst_48 = arith.constant 3.200000e+01 : f32
    %36 = vector.broadcast %cst_48 : f32 to vector<16x1xf32>
    %37 = arith.divf %35, %36 : vector<16x1xf32>
    %38 = vector.broadcast %37 : vector<16x1xf32> to vector<16x32xf32>
    %39 = arith.subf %31, %38 : vector<16x32xf32>
    %40 = vector.broadcast %37 : vector<16x1xf32> to vector<16x32xf32>
    %41 = arith.subf %31, %40 : vector<16x32xf32>
    %42 = arith.mulf %39, %41 : vector<16x32xf32>
    %cst_49 = arith.constant dense<0.000000e+00> : vector<16xf32>
    %43 = vector.multi_reduction <add>, %42, %cst_49 [1] : vector<16x32xf32> to vector<16xf32>
    %44 = vector.shape_cast %43 : vector<16xf32> to vector<16x1xf32>
    %cst_50 = arith.constant 3.200000e+01 : f32
    %45 = vector.broadcast %cst_50 : f32 to vector<16x1xf32>
    %46 = arith.divf %44, %45 : vector<16x1xf32>
    %47 = vector.broadcast %37 : vector<16x1xf32> to vector<16x32xf32>
    %48 = arith.subf %31, %47 : vector<16x32xf32>
    %cst_51 = arith.constant 9.99999974E-6 : f32
    %49 = vector.broadcast %cst_51 : f32 to vector<16x1xf32>
    %50 = arith.addf %46, %49 : vector<16x1xf32>
    %51 = math.rsqrt %50 : vector<16x1xf32>
    %52 = vector.broadcast %51 : vector<16x1xf32> to vector<16x32xf32>
    %53 = arith.mulf %48, %52 : vector<16x32xf32>
    %54 = vector.broadcast %32 : vector<1x32xf32> to vector<16x32xf32>
    %55 = arith.mulf %53, %54 : vector<16x32xf32>
    %56 = vector.broadcast %33 : vector<1x32xf32> to vector<16x32xf32>
    %57 = arith.addf %55, %56 : vector<16x32xf32>
    %cst_52 = arith.constant 0.000000e+00 : f32
    %58 = vector.broadcast %cst_52 : f32 to vector<2x1x32xf32>
    %c0_53 = arith.constant 0 : index
    %c0_54 = arith.constant 0 : index
    %c0_55 = arith.constant 0 : index
    %59 = vector.load %arg16[%c0_53, %c0_54, %c0_55] : memref<2x10x32xf32, #tpu.memory_space<vmem>>, vector<2x1x32xf32>
    tpu.vector_store %arg16[%c0_53, %c0_54, %c0_55], %58 {strides = array<i32>} : memref<2x10x32xf32, #tpu.memory_space<vmem>>, vector<2x1x32xf32>,
    %c0_56 = arith.constant 0 : index
    %c9_57 = arith.constant 9 : index
    %c0_58 = arith.constant 0 : index
    %60 = vector.load %arg16[%c0_56, %c9_57, %c0_58] : memref<2x10x32xf32, #tpu.memory_space<vmem>>, vector<2x1x32xf32>
    tpu.vector_store %arg16[%c0_56, %c9_57, %c0_58], %58 {strides = array<i32>} : memref<2x10x32xf32, #tpu.memory_space<vmem>>, vector<2x1x32xf32>,
    %61 = vector.extract_strided_slice %57 {offsets = [0, 0], sizes = [8, 32], strides = [1, 1]} : vector<16x32xf32> to vector<8x32xf32>
    %c0_59 = arith.constant 0 : index
    %c1_60 = arith.constant 1 : index
    %c0_61 = arith.constant 0 : index
    %62 = vector.load %arg16[%c0_59, %c1_60, %c0_61] : memref<2x10x32xf32, #tpu.memory_space<vmem>>, vector<1x8x32xf32>
    %63 = vector.shape_cast %62 : vector<1x8x32xf32> to vector<8x32xf32>
    %64 = vector.shape_cast %61 : vector<8x32xf32> to vector<1x8x32xf32>
    tpu.vector_store %arg16[%c0_59, %c1_60, %c0_61], %64 {strides = array<i32>} : memref<2x10x32xf32, #tpu.memory_space<vmem>>, vector<1x8x32xf32>,
    %65 = vector.extract_strided_slice %57 {offsets = [8, 0], sizes = [8, 32], strides = [1, 1]} : vector<16x32xf32> to vector<8x32xf32>
    %c1_62 = arith.constant 1 : index
    %c1_63 = arith.constant 1 : index
    %c0_64 = arith.constant 0 : index
    %66 = vector.load %arg16[%c1_62, %c1_63, %c0_64] : memref<2x10x32xf32, #tpu.memory_space<vmem>>, vector<1x8x32xf32>
    %67 = vector.shape_cast %66 : vector<1x8x32xf32> to vector<8x32xf32>
    %68 = vector.shape_cast %65 : vector<8x32xf32> to vector<1x8x32xf32>
    tpu.vector_store %arg16[%c1_62, %c1_63, %c0_64], %68 {strides = array<i32>} : memref<2x10x32xf32, #tpu.memory_space<vmem>>, vector<1x8x32xf32>,
    %c0_65 = arith.constant 0 : index
    %c0_66 = arith.constant 0 : index
    %c0_67 = arith.constant 0 : index
    %69 = vector.load %arg16[%c0_65, %c0_66, %c0_67] : memref<2x10x32xf32, #tpu.memory_space<vmem>>, vector<1x8x32xf32>
    %70 = vector.shape_cast %69 : vector<1x8x32xf32> to vector<8x32xf32>
    %c0_68 = arith.constant 0 : index
    %c0_69 = arith.constant 0 : index
    %71 = vector.load %arg17[%c0_68, %c0_69] : memref<16x96xf32, #tpu.memory_space<vmem>>, vector<8x32xf32>
    tpu.vector_store %arg17[%c0_68, %c0_69], %70 {strides = array<i32>} : memref<16x96xf32, #tpu.memory_space<vmem>>, vector<8x32xf32>,
    %c0_70 = arith.constant 0 : index
    %c1_71 = arith.constant 1 : index
    %c0_72 = arith.constant 0 : index
    %72 = vector.load %arg16[%c0_70, %c1_71, %c0_72] : memref<2x10x32xf32, #tpu.memory_space<vmem>>, vector<1x8x32xf32>
    %73 = vector.shape_cast %72 : vector<1x8x32xf32> to vector<8x32xf32>
    %c0_73 = arith.constant 0 : index
    %c32_74 = arith.constant 32 : index
    %74 = vector.load %arg17[%c0_73, %c32_74] : memref<16x96xf32, #tpu.memory_space<vmem>>, vector<8x32xf32>
    tpu.vector_store %arg17[%c0_73, %c32_74], %73 {strides = array<i32>} : memref<16x96xf32, #tpu.memory_space<vmem>>, vector<8x32xf32>,
    %c0_75 = arith.constant 0 : index
    %c2_76 = arith.constant 2 : index
    %c0_77 = arith.constant 0 : index
    %75 = vector.load %arg16[%c0_75, %c2_76, %c0_77] : memref<2x10x32xf32, #tpu.memory_space<vmem>>, vector<1x8x32xf32>
    %76 = vector.shape_cast %75 : vector<1x8x32xf32> to vector<8x32xf32>
    %c0_78 = arith.constant 0 : index
    %c64_79 = arith.constant 64 : index
    %77 = vector.load %arg17[%c0_78, %c64_79] : memref<16x96xf32, #tpu.memory_space<vmem>>, vector<8x32xf32>
    tpu.vector_store %arg17[%c0_78, %c64_79], %76 {strides = array<i32>} : memref<16x96xf32, #tpu.memory_space<vmem>>, vector<8x32xf32>,
    %c1_80 = arith.constant 1 : index
    %c0_81 = arith.constant 0 : index
    %c0_82 = arith.constant 0 : index
    %78 = vector.load %arg16[%c1_80, %c0_81, %c0_82] : memref<2x10x32xf32, #tpu.memory_space<vmem>>, vector<1x8x32xf32>
    %79 = vector.shape_cast %78 : vector<1x8x32xf32> to vector<8x32xf32>
    %c8_83 = arith.constant 8 : index
    %c0_84 = arith.constant 0 : index
    %80 = vector.load %arg17[%c8_83, %c0_84] : memref<16x96xf32, #tpu.memory_space<vmem>>, vector<8x32xf32>
    tpu.vector_store %arg17[%c8_83, %c0_84], %79 {strides = array<i32>} : memref<16x96xf32, #tpu.memory_space<vmem>>, vector<8x32xf32>,
    %c1_85 = arith.constant 1 : index
    %c1_86 = arith.constant 1 : index
    %c0_87 = arith.constant 0 : index
    %81 = vector.load %arg16[%c1_85, %c1_86, %c0_87] : memref<2x10x32xf32, #tpu.memory_space<vmem>>, vector<1x8x32xf32>
    %82 = vector.shape_cast %81 : vector<1x8x32xf32> to vector<8x32xf32>
    %c8_88 = arith.constant 8 : index
    %c32_89 = arith.constant 32 : index
    %83 = vector.load %arg17[%c8_88, %c32_89] : memref<16x96xf32, #tpu.memory_space<vmem>>, vector<8x32xf32>
    tpu.vector_store %arg17[%c8_88, %c32_89], %82 {strides = array<i32>} : memref<16x96xf32, #tpu.memory_space<vmem>>, vector<8x32xf32>,
    %c1_90 = arith.constant 1 : index
    %c2_91 = arith.constant 2 : index
    %c0_92 = arith.constant 0 : index
    %84 = vector.load %arg16[%c1_90, %c2_91, %c0_92] : memref<2x10x32xf32, #tpu.memory_space<vmem>>, vector<1x8x32xf32>
    %85 = vector.shape_cast %84 : vector<1x8x32xf32> to vector<8x32xf32>
    %c8_93 = arith.constant 8 : index
    %c64_94 = arith.constant 64 : index
    %86 = vector.load %arg17[%c8_93, %c64_94] : memref<16x96xf32, #tpu.memory_space<vmem>>, vector<8x32xf32>
    tpu.vector_store %arg17[%c8_93, %c64_94], %85 {strides = array<i32>} : memref<16x96xf32, #tpu.memory_space<vmem>>, vector<8x32xf32>,
    %c0_95 = arith.constant 0 : index
    %c0_96 = arith.constant 0 : index
    %87 = vector.load %arg17[%c0_95, %c0_96] : memref<16x96xf32, #tpu.memory_space<vmem>>, vector<16x96xf32>
    %88 = arith.truncf %87 : vector<16x96xf32> to vector<16x96xbf16>
    %c0_97 = arith.constant 0 : index
    %c0_98 = arith.constant 0 : index
    %89 = vector.load %arg6[%c0_97, %c0_98] : memref<96x32xbf16, #tpu.memory_space<vmem>>, vector<96x32xbf16>
    %cst_99 = arith.constant dense<0.000000e+00> : vector<16x32xf32>
    %90 = tpu.matmul %88, %89, %cst_99 {dimension_numbers = #tpu.dot_dimension_numbers<[1], [0], [0], [1], [0, 0, 1, 1], [], []>} : vector<16x96xbf16>, vector<96x32xbf16>, vector<16x32xf32> -> vector<16x32xf32>
    %c0_100 = arith.constant 0 : index
    %c0_101 = arith.constant 0 : index
    %91 = vector.load %arg7[%c0_100, %c0_101] : memref<1x32xf32, #tpu.memory_space<vmem>>, vector<1x32xf32>
    %92 = vector.broadcast %91 : vector<1x32xf32> to vector<16x32xf32>
    %93 = arith.addf %90, %92 : vector<16x32xf32>
    %cst_102 = arith.constant 0.000000e+00 : f32
    %94 = vector.broadcast %cst_102 : f32 to vector<16x32xf32>
    %95 = arith.maximumf %93, %94 : vector<16x32xf32>
    %c0_103 = arith.constant 0 : index
    %c0_104 = arith.constant 0 : index
    %96 = vector.load %arg8[%c0_103, %c0_104] : memref<1x32xf32, #tpu.memory_space<vmem>>, vector<1x32xf32>
    %c0_105 = arith.constant 0 : index
    %c0_106 = arith.constant 0 : index
    %97 = vector.load %arg9[%c0_105, %c0_106] : memref<1x32xf32, #tpu.memory_space<vmem>>, vector<1x32xf32>
    %cst_107 = arith.constant dense<0.000000e+00> : vector<16xf32>
    %98 = vector.multi_reduction <add>, %95, %cst_107 [1] : vector<16x32xf32> to vector<16xf32>
    %99 = vector.shape_cast %98 : vector<16xf32> to vector<16x1xf32>
    %cst_108 = arith.constant 3.200000e+01 : f32
    %100 = vector.broadcast %cst_108 : f32 to vector<16x1xf32>
    %101 = arith.divf %99, %100 : vector<16x1xf32>
    %102 = vector.broadcast %101 : vector<16x1xf32> to vector<16x32xf32>
    %103 = arith.subf %95, %102 : vector<16x32xf32>
    %104 = vector.broadcast %101 : vector<16x1xf32> to vector<16x32xf32>
    %105 = arith.subf %95, %104 : vector<16x32xf32>
    %106 = arith.mulf %103, %105 : vector<16x32xf32>
    %cst_109 = arith.constant dense<0.000000e+00> : vector<16xf32>
    %107 = vector.multi_reduction <add>, %106, %cst_109 [1] : vector<16x32xf32> to vector<16xf32>
    %108 = vector.shape_cast %107 : vector<16xf32> to vector<16x1xf32>
    %cst_110 = arith.constant 3.200000e+01 : f32
    %109 = vector.broadcast %cst_110 : f32 to vector<16x1xf32>
    %110 = arith.divf %108, %109 : vector<16x1xf32>
    %111 = vector.broadcast %101 : vector<16x1xf32> to vector<16x32xf32>
    %112 = arith.subf %95, %111 : vector<16x32xf32>
    %cst_111 = arith.constant 9.99999974E-6 : f32
    %113 = vector.broadcast %cst_111 : f32 to vector<16x1xf32>
    %114 = arith.addf %110, %113 : vector<16x1xf32>
    %115 = math.rsqrt %114 : vector<16x1xf32>
    %116 = vector.broadcast %115 : vector<16x1xf32> to vector<16x32xf32>
    %117 = arith.mulf %112, %116 : vector<16x32xf32>
    %118 = vector.broadcast %96 : vector<1x32xf32> to vector<16x32xf32>
    %119 = arith.mulf %117, %118 : vector<16x32xf32>
    %120 = vector.broadcast %97 : vector<1x32xf32> to vector<16x32xf32>
    %121 = arith.addf %119, %120 : vector<16x32xf32>
    %122 = vector.shape_cast %121 : vector<16x32xf32> to vector<2x8x32xf32>
    %c0_112 = arith.constant 0 : index
    %c0_113 = arith.constant 0 : index
    %123 = vector.load %arg10[%c0_112, %c0_113] : memref<1x32xf32, #tpu.memory_space<vmem>>, vector<1x32xf32>
    %124 = vector.shape_cast %123 : vector<1x32xf32> to vector<1x1x32xf32>
    %125 = vector.broadcast %124 : vector<1x1x32xf32> to vector<2x8x32xf32>
    %126 = arith.mulf %122, %125 : vector<2x8x32xf32>
    %cst_114 = arith.constant dense<0.000000e+00> : vector<2x8xf32>
    %127 = vector.multi_reduction <add>, %126, %cst_114 [2] : vector<2x8x32xf32> to vector<2x8xf32>
    %c0_115 = arith.constant 0 : index
    %c0_116 = arith.constant 0 : index
    %128 = vector.load %arg11[%c0_115, %c0_116] : memref<1x1xf32, #tpu.memory_space<vmem>>, vector<1x1xf32>
    %129 = vector.broadcast %128 : vector<1x1xf32> to vector<2x8xf32>
    %130 = arith.addf %127, %129 : vector<2x8xf32>
    %c0_117 = arith.constant 0 : index
    %c0_118 = arith.constant 0 : index
    %131 = vector.load %arg12[%c0_117, %c0_118] : memref<2x8xf32, #tpu.memory_space<vmem>>, vector<2x8xf32>
    %cst_119 = arith.constant 0.000000e+00 : f32
    %132 = vector.broadcast %cst_119 : f32 to vector<2x8xf32>
    %133 = arith.cmpf one, %131, %132 : vector<2x8xf32>
    %cst_120 = arith.constant 0.000000e+00 : f32
    %134 = vector.broadcast %cst_120 : f32 to vector<2x8xf32>
    %135 = arith.select %133, %134, %130 : vector<2x8xi1>, vector<2x8xf32>
    %c0_121 = arith.constant 0 : index
    %c0_122 = arith.constant 0 : index
    %136 = vector.load %arg13[%c0_121, %c0_122] : memref<2x8xf32, #tpu.memory_space<vmem>>, vector<2x8xf32>
    tpu.vector_store %arg13[%c0_121, %c0_122], %135 {strides = array<i32>} : memref<2x8xf32, #tpu.memory_space<vmem>>, vector<2x8xf32>,
    return
  }
  func.func @transform_0(%arg0: i32) -> (i32, i32, i32) {
    %c0_i32 = arith.constant 0 : i32
    %c0_i32_0 = arith.constant 0 : i32
    %c0_i32_1 = arith.constant 0 : i32
    return %arg0, %c0_i32, %c0_i32_0 : i32, i32, i32
  }
  func.func @transform_1(%arg0: i32) -> (i32, i32) {
    %c0_i32 = arith.constant 0 : i32
    %c0_i32_0 = arith.constant 0 : i32
    %c0_i32_1 = arith.constant 0 : i32
    return %c0_i32, %c0_i32_0 : i32, i32
  }
  func.func @transform_2(%arg0: i32) -> (i32, i32) {
    %c0_i32 = arith.constant 0 : i32
    %c0_i32_0 = arith.constant 0 : i32
    %c0_i32_1 = arith.constant 0 : i32
    return %c0_i32, %c0_i32_0 : i32, i32
  }
  func.func @transform_3(%arg0: i32) -> (i32, i32) {
    %c0_i32 = arith.constant 0 : i32
    %c0_i32_0 = arith.constant 0 : i32
    %c0_i32_1 = arith.constant 0 : i32
    return %c0_i32, %c0_i32_0 : i32, i32
  }
  func.func @transform_4(%arg0: i32) -> (i32, i32) {
    %c0_i32 = arith.constant 0 : i32
    %c0_i32_0 = arith.constant 0 : i32
    %c0_i32_1 = arith.constant 0 : i32
    return %c0_i32, %c0_i32_0 : i32, i32
  }
  func.func @transform_5(%arg0: i32) -> (i32, i32) {
    %c0_i32 = arith.constant 0 : i32
    %c0_i32_0 = arith.constant 0 : i32
    %c0_i32_1 = arith.constant 0 : i32
    return %c0_i32, %c0_i32_0 : i32, i32
  }
  func.func @transform_6(%arg0: i32) -> (i32, i32) {
    %c0_i32 = arith.constant 0 : i32
    %c0_i32_0 = arith.constant 0 : i32
    %c0_i32_1 = arith.constant 0 : i32
    return %c0_i32, %c0_i32_0 : i32, i32
  }
  func.func @transform_7(%arg0: i32) -> (i32, i32) {
    %c0_i32 = arith.constant 0 : i32
    %c0_i32_0 = arith.constant 0 : i32
    %c0_i32_1 = arith.constant 0 : i32
    return %c0_i32, %c0_i32_0 : i32, i32
  }
  func.func @transform_8(%arg0: i32) -> (i32, i32) {
    %c0_i32 = arith.constant 0 : i32
    %c0_i32_0 = arith.constant 0 : i32
    %c0_i32_1 = arith.constant 0 : i32
    return %c0_i32, %c0_i32_0 : i32, i32
  }
  func.func @transform_9(%arg0: i32) -> (i32, i32) {
    %c0_i32 = arith.constant 0 : i32
    %c0_i32_0 = arith.constant 0 : i32
    %c0_i32_1 = arith.constant 0 : i32
    return %c0_i32, %c0_i32_0 : i32, i32
  }
  func.func @transform_10(%arg0: i32) -> (i32, i32) {
    %c0_i32 = arith.constant 0 : i32
    %c0_i32_0 = arith.constant 0 : i32
    %c0_i32_1 = arith.constant 0 : i32
    return %c0_i32, %c0_i32_0 : i32, i32
  }
  func.func @transform_11(%arg0: i32) -> (i32, i32) {
    %c0_i32 = arith.constant 0 : i32
    %c0_i32_0 = arith.constant 0 : i32
    return %arg0, %c0_i32 : i32, i32
  }
  func.func @transform_12(%arg0: i32) -> (i32, i32) {
    %c0_i32 = arith.constant 0 : i32
    %c0_i32_0 = arith.constant 0 : i32
    return %arg0, %c0_i32 : i32, i32
  }
}

</mosaic_0001>

<llo_original>
// kernel: tpu_custom_call.1
$region0: #{tpu_custom_call.1}
  #allocation0 [shape = 'u32[]', space=smem, size = 0x4, offset = 0x4, fixed_abs, tag = 'smem constant byte address 0x4 - core index']
  #allocation1 [shape = 'u32[144,128]{1,0:T(1,128)}', space=vmem, size = 0x12000, scoped, tag = 'internal scratch']
  #allocation2 [shape = 'f32[2,10,32]{2,1,0:T(8,128)}', space=vmem, size = 0x4000, scoped, tag = 'scratch operand']
  #allocation3 [shape = 'f32[16,96]{1,0:T(8,128)}', space=vmem, size = 0x2000, scoped, tag = 'scratch operand']
  #allocation4 [shape = 'f32[2,10,32]{2,1,0:T(8,128)}', space=vmem, size = 0x4000, scoped, tag = 'scratch operand']
  #allocation5 [shape = 'f32[16,96]{1,0:T(8,128)}', space=vmem, size = 0x2000, scoped, tag = 'scratch operand']
  #allocation6 [shape = 'f32[1,1]{1,0:T(1,128)S(1)}', space=vmem, size = 0x200, scoped, tag = 'scoped memory for tpu_custom_call.1']
  %s0 = inlined_call_operand.vmem [shape: f32[2,8,32], index: 0, kind: input, shape index: {}]
  %s1 = inlined_call_operand.vmem [shape: bf16[96,32], index: 1, kind: input, shape index: {}]
  %s2 = inlined_call_operand.vmem [shape: f32[1,32], index: 2, kind: input, shape index: {}]
  %s3 = inlined_call_operand.vmem [shape: f32[1,32], index: 3, kind: input, shape index: {}]
  %s4 = inlined_call_operand.vmem [shape: f32[1,32], index: 4, kind: input, shape index: {}]
  %s5 = inlined_call_operand.vmem [shape: bf16[96,32], index: 5, kind: input, shape index: {}]
  %s6 = inlined_call_operand.vmem [shape: f32[1,32], index: 6, kind: input, shape index: {}]
  %s7 = inlined_call_operand.vmem [shape: f32[1,32], index: 7, kind: input, shape index: {}]
  %s8 = inlined_call_operand.vmem [shape: f32[1,32], index: 8, kind: input, shape index: {}]
  %s9 = inlined_call_operand.vmem [shape: f32[1,32], index: 9, kind: input, shape index: {}]
  %s10 = inlined_call_operand.<no memory space> [shape: f32[1,1], index: 10, kind: input, shape index: {}]
  %s11 = inlined_call_operand.vmem [shape: f32[2,8], index: 11, kind: input, shape index: {}]
  %s12 = inlined_call_operand.hbm [shape: f32[2,8], index: 12, kind: output, shape index: {}]
  %s13 = sld [smem:[#allocation0]]
  $region58: #{tpu_custom_call.1} parent=0
    _
  %s15 = ssub.s32 1, %s13
  %s16 = scalar_select 0, %s15, %s13
  %v17 = vstv %s10
  %18 = vst [vmem:[#allocation6] sm:$0x1] %v17
  $region1: #{tpu_custom_call.1} parent=0
    #allocation7 [shape = 'u8[1024]{0}', space=vmem, size = 0x400, scoped, tag = 'output window, operand 0, single buffered']
    #allocation8 [shape = 's32[1]{0}', space=sflag, size = 0x4, scoped, tag = 'scoped memory for tpu_custom_call.1']
    %19 = vsyncpa [#allocation8], 0
    // Predicated region
    $region2: #{tpu_custom_call.1} parent=1 // pred_check
      _
    $region3: #{tpu_custom_call.1} parent=1 // pred_check_branch
      %21 = sbr.rel (0) target = $region5
    $region4: #{tpu_custom_call.1} parent=1 // pred_region
      _
    $region5: #{tpu_custom_call.1} parent=1 // pred_fallthru
      _
    // Predicated region
    $region6: #{tpu_custom_call.1} parent=1 // pred_check
      _
    $region7: #{tpu_custom_call.1} parent=1 // pred_check_branch
      %23 = sbr.rel (0) target = $region9
    $region8: #{tpu_custom_call.1} parent=1 // pred_region
      _
    $region9: #{tpu_custom_call.1} parent=1 // pred_fallthru
      _
    // Predicated region
    $region10: #{tpu_custom_call.1} parent=1 // pred_check
      _
    $region11: #{tpu_custom_call.1} parent=1 // pred_check_branch
      %25 = sbr.rel (0) target = $region13
    $region12: #{tpu_custom_call.1} parent=1 // pred_region
      _
    $region13: #{tpu_custom_call.1} parent=1 // pred_fallthru
      _
    // Predicated region
    $region14: #{tpu_custom_call.1} parent=1 // pred_check
      _
    $region15: #{tpu_custom_call.1} parent=1 // pred_check_branch
      %27 = sbr.rel (0) target = $region17
    $region16: #{tpu_custom_call.1} parent=1 // pred_region
      _
    $region17: #{tpu_custom_call.1} parent=1 // pred_fallthru
      _
    // Predicated region
    $region18: #{tpu_custom_call.1} parent=1 // pred_check
      _
    $region19: #{tpu_custom_call.1} parent=1 // pred_check_branch
      %29 = sbr.rel (0) target = $region21
    $region20: #{tpu_custom_call.1} parent=1 // pred_region
      _
    $region21: #{tpu_custom_call.1} parent=1 // pred_fallthru
      _
    // Predicated region
    $region22: #{tpu_custom_call.1} parent=1 // pred_check
      _
    $region23: #{tpu_custom_call.1} parent=1 // pred_check_branch
      %31 = sbr.rel (0) target = $region25
    $region24: #{tpu_custom_call.1} parent=1 // pred_region
      _
    $region25: #{tpu_custom_call.1} parent=1 // pred_fallthru
      _
    // Predicated region
    $region26: #{tpu_custom_call.1} parent=1 // pred_check
      _
    $region27: #{tpu_custom_call.1} parent=1 // pred_check_branch
      %33 = sbr.rel (0) target = $region29
    $region28: #{tpu_custom_call.1} parent=1 // pred_region
      _
    $region29: #{tpu_custom_call.1} parent=1 // pred_fallthru
      _
    // Predicated region
    $region30: #{tpu_custom_call.1} parent=1 // pred_check
      _
    $region31: #{tpu_custom_call.1} parent=1 // pred_check_branch
      %35 = sbr.rel (0) target = $region33
    $region32: #{tpu_custom_call.1} parent=1 // pred_region
      _
    $region33: #{tpu_custom_call.1} parent=1 // pred_fallthru
      _
    // Predicated region
    $region34: #{tpu_custom_call.1} parent=1 // pred_check
      _
    $region35: #{tpu_custom_call.1} parent=1 // pred_check_branch
      %37 = sbr.rel (0) target = $region37
    $region36: #{tpu_custom_call.1} parent=1 // pred_region
      _
    $region37: #{tpu_custom_call.1} parent=1 // pred_fallthru
      _
    // Predicated region
    $region38: #{tpu_custom_call.1} parent=1 // pred_check
      _
    $region39: #{tpu_custom_call.1} parent=1 // pred_check_branch
      %39 = sbr.rel (0) target = $region41
    $region40: #{tpu_custom_call.1} parent=1 // pred_region
      _
    $region41: #{tpu_custom_call.1} parent=1 // pred_fallthru
      _
    // Predicated region
    $region42: #{tpu_custom_call.1} parent=1 // pred_check
      _
    $region43: #{tpu_custom_call.1} parent=1 // pred_check_branch
      %41 = sbr.rel (0) target = $region45
    $region44: #{tpu_custom_call.1} parent=1 // pred_region
      _
    $region45: #{tpu_custom_call.1} parent=1 // pred_fallthru
      _
    // Predicated region
    $region46: #{tpu_custom_call.1} parent=1 // pred_check
      _
    $region47: #{tpu_custom_call.1} parent=1 // pred_check_branch
      %43 = sbr.rel (0) target = $region49
    $region48: #{tpu_custom_call.1} parent=1 // pred_region
      _
    $region49: #{tpu_custom_call.1} parent=1 // pred_fallthru
      _
    %vm45 = vcmask 253952
    %46 = vst.msk [vmem:[#allocation2] sm:$0x1] %vm45, 0.0
    %47 = vst.msk [vmem:[#allocation2 + $0x10] sm:$0x1] %vm45, 0.0
    %48 = vst.msk [vmem:[#allocation2 + $0x9] sm:$0x1] %vm45, 0.0
    %49 = vst.msk [vmem:[#allocation2 + $0x19] sm:$0x1] %vm45, 0.0
    %v50 = vld [vmem:[%s0] sm:$0xff]
    %v51 = vld [vmem:[%s0 + $0x8] sm:$0xff]
    %vm52 = vcmask 261120
    %53 = vst.msk [vmem:[#allocation2 + $0x1] sm:$0xff] %vm52, %v50
    %54 = vst.msk [vmem:[#allocation2 + $0x11] sm:$0xff] %vm52, %v51
    %v55 = vld [vmem:[#allocation2] sm:$0xff]
    %56 = vst.msk [vmem:[#allocation3] sm:$0xff] %vm52, %v55
    %v57 = vld [vmem:[#allocation2 + $0x1] sm:$0xff]
    %59 = vrot.lane.b32.xlu0 %v57, 32
    %v60 = vpop.permute.xlu0 %59
    %vm62 = vcmask 523520
    %63 = vst.msk [vmem:[#allocation3] sm:$0xff] %vm62, %v60
    %v64 = vld [vmem:[#allocation2 + $0x2] sm:$0xff]
    %66 = vrot.lane.b32.xlu0 %v64, 64
    %v67 = vpop.permute.xlu0 %66
    %vm69 = vcmask 785920
    %70 = vst.msk [vmem:[#allocation3] sm:$0xff] %vm69, %v67
    %s71 = scalar_lea.vmem [#allocation2], 16
    %v72 = vld [vmem:[%s71] sm:$0xff]
    %73 = vst.msk [vmem:[#allocation3 + $0x8] sm:$0xff] %vm52, %v72
    %v74 = vld [vmem:[%s71 + $0x1] sm:$0xff]
    %76 = vrot.lane.b32.xlu0 %v74, 32
    %v77 = vpop.permute.xlu0 %76
    %79 = vst.msk [vmem:[#allocation3 + $0x8] sm:$0xff] %vm62, %v77
    %v80 = vld [vmem:[%s71 + $0x2] sm:$0xff]
    %82 = vrot.lane.b32.xlu0 %v80, 64
    %v83 = vpop.permute.xlu0 %82
    %85 = vst.msk [vmem:[#allocation3 + $0x8] sm:$0xff] %vm69, %v83
    %v86 = vld [vmem:[#allocation3] sm:$0xff]
    %v87 = vld [vmem:[#allocation3 + $0x8] sm:$0xff]
    %v88 = vpack.c.bf16 %v87, %v86
    %v89 = vld [vmem:[%s1] sm:$0xf]
    %v90 = vld [vmem:[%s1 + $0x4] sm:$0xf]
    %v91 = vld [vmem:[%s1 + $0x8] sm:$0xf]
    %v92 = vld [vmem:[%s1 + $0xc] sm:$0xf]
    %v93 = vld [vmem:[%s1 + $0x10] sm:$0xf]
    %v94 = vld [vmem:[%s1 + $0x14] sm:$0xf]
    %v95 = vld [vmem:[%s1 + $0x18] sm:$0xf]
    %v96 = vld [vmem:[%s1 + $0x1c] sm:$0xf]
    %v97 = vld [vmem:[%s1 + $0x20] sm:$0xf]
    %v98 = vld [vmem:[%s1 + $0x24] sm:$0xf]
    %v99 = vld [vmem:[%s1 + $0x28] sm:$0xf]
    %v100 = vld [vmem:[%s1 + $0x2c] sm:$0xf]
    %v101 = vld [vmem:[%s2] sm:$0x1]
    %v103 = vlaneseq
    %v104 = vshrl.u32 %v103, 7
    %v105 = vsub.s32 0, %v104
    %v106 = vrot.slane %v101, %v105
    %v120 = vunpack.c.l.b16 %v89
    %v121 = vunpack.c.l.b16 %v90
    %v122 = vunpack.c.l.b16 %v91
    %v123 = vunpack.c.l.b16 %v92
    %v124 = vunpack.c.l.b16 %v93
    %v125 = vunpack.c.l.b16 %v94
    %v126 = vunpack.c.l.b16 %v95
    %v127 = vunpack.c.l.b16 %v96
    %v128 = vunpack.c.l.b16 %v97
    %v129 = vunpack.c.l.b16 %v98
    %v130 = vunpack.c.l.b16 %v99
    %v131 = vunpack.c.l.b16 %v100
    %v132 = vpack.c.b16 %v121, %v120
    %v133 = vpack.c.b16 %v123, %v122
    %v134 = vpack.c.b16 %v125, %v124
    %v135 = vpack.c.b16 %v127, %v126
    %v136 = vpack.c.b16 %v129, %v128
    %v137 = vpack.c.b16 %v131, %v130
    %vm144 = vcmask 785408
    %v146 = vsel %vm144, %v88, 0
    %148 = vmatprep.subr.bf16.mxu0 0
    %149 = vmatpush1.bf16.msra.mxu0 0
    %150 = vmatprep.subr.bf16.mxu0 0
    %151 = vmatpush1.bf16.msra.mxu0 0
    %152 = vmatprep.subr.bf16.mxu0 0
    %153 = vmatpush1.bf16.msra.mxu0 %v137
    %154 = vmatprep.subr.bf16.mxu0 0
    %155 = vmatpush1.bf16.msra.mxu0 %v136
    %156 = vmatprep.subr.bf16.mxu0 0
    %157 = vmatpush1.bf16.msra.mxu0 %v135
    %158 = vmatprep.subr.bf16.mxu0 0
    %159 = vmatpush1.bf16.msra.mxu0 %v134
    %160 = vmatprep.subr.bf16.mxu0 0
    %161 = vmatpush1.bf16.msra.mxu0 %v133
    %162 = vmatprep.subr.bf16.mxu0 0
    %163 = vmatpush1.bf16.msra.mxu0 %v132
    %164 = vmatprep.subr.bf16.mxu0 0
    %165 = vmatpush2.bf16.msra.mxu0 0
    %166 = vmatprep.subr.bf16.mxu0 0
    %167 = vmatpush2.bf16.msra.mxu0 0
    %168 = vmatprep.subr.bf16.mxu0 0
    %169 = vmatpush2.bf16.msra.mxu0 0
    %170 = vmatprep.subr.bf16.mxu0 0
    %171 = vmatpush2.bf16.msra.mxu0 0
    %172 = vmatprep.subr.bf16.mxu0 0
    %173 = vmatpush2.bf16.msra.mxu0 0
    %174 = vmatprep.subr.bf16.mxu0 0
    %175 = vmatpush2.bf16.msra.mxu0 0
    %176 = vmatprep.subr.bf16.mxu0 0
    %177 = vmatpush2.bf16.msra.mxu0 0
    %178 = vmatprep.subr.bf16.mxu0 0
    %179 = vmatpush2.bf16.msra.mxu0 0
    %180 = vmatprep.mubr.bf16.mxu0 0
    %181 = vmatmul.mubr.bf16.gmra.mxu0 %v146
    %v182 = vpop.f32.mrf.mxu0
    %v183 = vadd.f32 %v106, %v182
    %v184 = vpop.f32.mrf.mxu0
    %v185 = vpop.f32.mrf.mxu0
    %v186 = vadd.f32 %v106, %v185
    %v187 = vpop.f32.mrf.mxu0
    %188 = vdwg.mxu0
    %v189 = vmax.f32 %v183, 0.0
    %v190 = vmax.f32 %v186, 0.0
    %v191 = vld [vmem:[%s3] sm:$0x1]
    %v192 = vld [vmem:[%s4] sm:$0x1]
    %v193 = vsel %vm52, %v189, 0.0
    %194 = vadd.xlane.f32.xlu0 %v193
    %v195 = vpop.xlane.xlu0 %194
    %v196 = vsel %vm52, %v190, 0.0
    %197 = vadd.xlane.f32.xlu0 %v196
    %v198 = vpop.xlane.xlu0 %197
    %v199 = vrcp.pop 32.0
    %v200 = vmul.f32 %v195, %v199
    %v201 = vmul.f32 %v198, %v199
    %v202 = vsub.f32 %v189, %v200
    %v203 = vsub.f32 %v190, %v201
    %v204 = vmul.f32 %v202, %v202
    %v205 = vmul.f32 %v203, %v203
    %v206 = vsel %vm52, %v204, 0.0
    %207 = vadd.xlane.f32.xlu0 %v206
    %v208 = vpop.xlane.xlu0 %207
    %v209 = vsel %vm52, %v205, 0.0
    %210 = vadd.xlane.f32.xlu0 %v209
    %v211 = vpop.xlane.xlu0 %210
    %v212 = vmul.f32 %v208, %v199
    %v213 = vmul.f32 %v211, %v199
    %v214 = vadd.f32 %v212, 1e-05
    %v215 = vadd.f32 %v213, 1e-05
    %v216 = vrsqrt.pop %v214
    %v217 = vrsqrt.pop %v215
    %v218 = vmul.f32 %v202, %v216
    %v219 = vmul.f32 %v203, %v217
    %v221 = vlaneseq
    %v222 = vshrl.u32 %v221, 7
    %v223 = vsub.s32 0, %v222
    %v224 = vrot.slane %v191, %v223
    %v226 = vmul.f32 %v218, %v224
    %v227 = vmul.f32 %v219, %v224
    %v229 = vlaneseq
    %v230 = vshrl.u32 %v229, 7
    %v231 = vsub.s32 0, %v230
    %v232 = vrot.slane %v192, %v231
    %v234 = vadd.f32 %v226, %v232
    %v235 = vadd.f32 %v227, %v232
    %236 = vst.msk [vmem:[#allocation4] sm:$0x1] %vm45, 0.0
    %237 = vst.msk [vmem:[#allocation4 + $0x10] sm:$0x1] %vm45, 0.0
    %238 = vst.msk [vmem:[#allocation4 + $0x9] sm:$0x1] %vm45, 0.0
    %239 = vst.msk [vmem:[#allocation4 + $0x19] sm:$0x1] %vm45, 0.0
    %240 = vst.msk [vmem:[#allocation4 + $0x1] sm:$0xff] %vm52, %v234
    %s241 = scalar_lea.vmem [#allocation4], 16
    %242 = vst.msk [vmem:[%s241 + $0x1] sm:$0xff] %vm52, %v235
    %v243 = vld [vmem:[#allocation4] sm:$0xff]
    %244 = vst.msk [vmem:[#allocation5] sm:$0xff] %vm52, %v243
    %v245 = vld [vmem:[#allocation4 + $0x1] sm:$0xff]
    %247 = vrot.lane.b32.xlu0 %v245, 32
    %v248 = vpop.permute.xlu0 %247
    %250 = vst.msk [vmem:[#allocation5] sm:$0xff] %vm62, %v248
    %v251 = vld [vmem:[#allocation4 + $0x2] sm:$0xff]
    %253 = vrot.lane.b32.xlu0 %v251, 64
    %v254 = vpop.permute.xlu0 %253
    %256 = vst.msk [vmem:[#allocation5] sm:$0xff] %vm69, %v254
    %v257 = vld [vmem:[%s241] sm:$0xff]
    %258 = vst.msk [vmem:[#allocation5 + $0x8] sm:$0xff] %vm52, %v257
    %v259 = vld [vmem:[%s241 + $0x1] sm:$0xff]
    %261 = vrot.lane.b32.xlu0 %v259, 32
    %v262 = vpop.permute.xlu0 %261
    %264 = vst.msk [vmem:[#allocation5 + $0x8] sm:$0xff] %vm62, %v262
    %v265 = vld [vmem:[%s241 + $0x2] sm:$0xff]
    %267 = vrot.lane.b32.xlu0 %v265, 64
    %v268 = vpop.permute.xlu0 %267
    %270 = vst.msk [vmem:[#allocation5 + $0x8] sm:$0xff] %vm69, %v268
    %v271 = vld [vmem:[#allocation5] sm:$0xff]
    %v272 = vld [vmem:[#allocation5 + $0x8] sm:$0xff]
    %v273 = vpack.c.bf16 %v272, %v271
    %v274 = vld [vmem:[%s5] sm:$0xf]
    %v275 = vld [vmem:[%s5 + $0x4] sm:$0xf]
    %v276 = vld [vmem:[%s5 + $0x8] sm:$0xf]
    %v277 = vld [vmem:[%s5 + $0xc] sm:$0xf]
    %v278 = vld [vmem:[%s5 + $0x10] sm:$0xf]
    %v279 = vld [vmem:[%s5 + $0x14] sm:$0xf]
    %v280 = vld [vmem:[%s5 + $0x18] sm:$0xf]
    %v281 = vld [vmem:[%s5 + $0x1c] sm:$0xf]
    %v282 = vld [vmem:[%s5 + $0x20] sm:$0xf]
    %v283 = vld [vmem:[%s5 + $0x24] sm:$0xf]
    %v284 = vld [vmem:[%s5 + $0x28] sm:$0xf]
    %v285 = vld [vmem:[%s5 + $0x2c] sm:$0xf]
    %v286 = vld [vmem:[%s6] sm:$0x1]
    %v288 = vlaneseq
    %v289 = vshrl.u32 %v288, 7
    %v290 = vsub.s32 0, %v289
    %v291 = vrot.slane %v286, %v290
    %v305 = vunpack.c.l.b16 %v274
    %v306 = vunpack.c.l.b16 %v275
    %v307 = vunpack.c.l.b16 %v276
    %v308 = vunpack.c.l.b16 %v277
    %v309 = vunpack.c.l.b16 %v278
    %v310 = vunpack.c.l.b16 %v279
    %v311 = vunpack.c.l.b16 %v280
    %v312 = vunpack.c.l.b16 %v281
    %v313 = vunpack.c.l.b16 %v282
    %v314 = vunpack.c.l.b16 %v283
    %v315 = vunpack.c.l.b16 %v284
    %v316 = vunpack.c.l.b16 %v285
    %v317 = vpack.c.b16 %v306, %v305
    %v318 = vpack.c.b16 %v308, %v307
    %v319 = vpack.c.b16 %v310, %v309
    %v320 = vpack.c.b16 %v312, %v311
    %v321 = vpack.c.b16 %v314, %v313
    %v322 = vpack.c.b16 %v316, %v315
    %v330 = vsel %vm144, %v273, 0
    %332 = vmatprep.subr.bf16.mxu0 0
    %333 = vmatpush1.bf16.msra.mxu0 0
    %334 = vmatprep.subr.bf16.mxu0 0
    %335 = vmatpush1.bf16.msra.mxu0 0
    %336 = vmatprep.subr.bf16.mxu0 0
    %337 = vmatpush1.bf16.msra.mxu0 %v322
    %338 = vmatprep.subr.bf16.mxu0 0
    %339 = vmatpush1.bf16.msra.mxu0 %v321
    %340 = vmatprep.subr.bf16.mxu0 0
    %341 = vmatpush1.bf16.msra.mxu0 %v320
    %342 = vmatprep.subr.bf16.mxu0 0
    %343 = vmatpush1.bf16.msra.mxu0 %v319
    %344 = vmatprep.subr.bf16.mxu0 0
    %345 = vmatpush1.bf16.msra.mxu0 %v318
    %346 = vmatprep.subr.bf16.mxu0 0
    %347 = vmatpush1.bf16.msra.mxu0 %v317
    %348 = vmatprep.subr.bf16.mxu0 0
    %349 = vmatpush2.bf16.msra.mxu0 0
    %350 = vmatprep.subr.bf16.mxu0 0
    %351 = vmatpush2.bf16.msra.mxu0 0
    %352 = vmatprep.subr.bf16.mxu0 0
    %353 = vmatpush2.bf16.msra.mxu0 0
    %354 = vmatprep.subr.bf16.mxu0 0
    %355 = vmatpush2.bf16.msra.mxu0 0
    %356 = vmatprep.subr.bf16.mxu0 0
    %357 = vmatpush2.bf16.msra.mxu0 0
    %358 = vmatprep.subr.bf16.mxu0 0
    %359 = vmatpush2.bf16.msra.mxu0 0
    %360 = vmatprep.subr.bf16.mxu0 0
    %361 = vmatpush2.bf16.msra.mxu0 0
    %362 = vmatprep.subr.bf16.mxu0 0
    %363 = vmatpush2.bf16.msra.mxu0 0
    %364 = vmatprep.mubr.bf16.mxu0 0
    %365 = vmatmul.mubr.bf16.gmra.mxu0 %v330
    %v366 = vpop.f32.mrf.mxu0
    %v367 = vadd.f32 %v291, %v366
    %v368 = vpop.f32.mrf.mxu0
    %v369 = vpop.f32.mrf.mxu0
    %v370 = vadd.f32 %v291, %v369
    %v371 = vpop.f32.mrf.mxu0
    %372 = vdwg.mxu0
    %v373 = vmax.f32 %v367, 0.0
    %v374 = vmax.f32 %v370, 0.0
    %v375 = vld [vmem:[%s7] sm:$0x1]
    %v376 = vld [vmem:[%s8] sm:$0x1]
    %v377 = vsel %vm52, %v373, 0.0
    %378 = vadd.xlane.f32.xlu0 %v377
    %v379 = vpop.xlane.xlu0 %378
    %v380 = vsel %vm52, %v374, 0.0
    %381 = vadd.xlane.f32.xlu0 %v380
    %v382 = vpop.xlane.xlu0 %381
    %v383 = vmul.f32 %v379, %v199
    %v384 = vmul.f32 %v382, %v199
    %v385 = vsub.f32 %v373, %v383
    %v386 = vsub.f32 %v374, %v384
    %v387 = vmul.f32 %v385, %v385
    %v388 = vmul.f32 %v386, %v386
    %v389 = vsel %vm52, %v387, 0.0
    %390 = vadd.xlane.f32.xlu0 %v389
    %v391 = vpop.xlane.xlu0 %390
    %v392 = vsel %vm52, %v388, 0.0
    %393 = vadd.xlane.f32.xlu0 %v392
    %v394 = vpop.xlane.xlu0 %393
    %v395 = vmul.f32 %v391, %v199
    %v396 = vmul.f32 %v394, %v199
    %v397 = vadd.f32 %v395, 1e-05
    %v398 = vadd.f32 %v396, 1e-05
    %v399 = vrsqrt.pop %v397
    %v400 = vrsqrt.pop %v398
    %v401 = vmul.f32 %v385, %v399
    %v402 = vmul.f32 %v386, %v400
    %v404 = vlaneseq
    %v405 = vshrl.u32 %v404, 7
    %v406 = vsub.s32 0, %v405
    %v407 = vrot.slane %v375, %v406
    %v409 = vmul.f32 %v401, %v407
    %v410 = vmul.f32 %v402, %v407
    %v412 = vlaneseq
    %v413 = vshrl.u32 %v412, 7
    %v414 = vsub.s32 0, %v413
    %v415 = vrot.slane %v376, %v414
    %v417 = vadd.f32 %v409, %v415
    %v418 = vadd.f32 %v410, %v415
    %v419 = vld [vmem:[%s9] sm:$0x1]
    %v421 = vlaneseq
    %v422 = vshrl.u32 %v421, 7
    %v423 = vsub.s32 0, %v422
    %v424 = vrot.slane %v419, %v423
    %v426 = vmul.f32 %v417, %v424
    %v427 = vmul.f32 %v418, %v424
    %v428 = vsel %vm52, %v426, 0.0
    %429 = vadd.xlane.f32.xlu0 %v428
    %v430 = vpop.xlane.xlu0 %429
    %v431 = vsel %vm52, %v427, 0.0
    %432 = vadd.xlane.f32.xlu0 %v431
    %v433 = vpop.xlane.xlu0 %432
    %v434 = vld [vmem:[#allocation6] sm:$0x1]
    %v436 = vlaneseq
    %v437 = vshrl.u32 %v436, 7
    %v438 = vsub.s32 0, %v437
    %v439 = vrot.slane %v434, %v438
    %440 = vset.pattern.permute.xlu0 0
    %441 = vperm.xlu0 %440, %v439
    %v442 = vpop.permute.xlu0 %441
    %v444 = vadd.f32 %v430, %v442
    %v445 = vadd.f32 %v433, %v442
    %v446 = vld [vmem:[%s11] sm:$0x3]
    %vm447 = vcmp.ne.f32.partialorder %v446, 0.0
    %v450 = vlaneseq
    %v451 = vand.u32 %v450, 127
    %v452 = vlaneseq
    %v453 = vshrl.u32 %v452, 7
    %v454 = vsub.s32 %v451, %v453
    %v455 = vrot.slane %v444, %v454
    %v456 = vlaneseq
    %v457 = vshrl.u32 %v456, 7
    %v458 = vsub.s32 %v451, %v457
    %v459 = vrot.slane %v445, %v458
    %vm460 = vcmask 1041409
    %v461 = vsel %vm460, %v459, %v455
    %v463 = vsel %vm447, 0.0, %v461
    %vm464 = vcmask 58368
    %465 = vst.msk [vmem:[#allocation7] sm:$0x3] %vm464, %v463
    // Predicated region
    $region50: #{tpu_custom_call.1} parent=1 // pred_check
      _
    $region51: #{tpu_custom_call.1} parent=1 // pred_check_branch
      %467 = sbr.rel (0) target = $region53
    $region52: #{tpu_custom_call.1} parent=1 // pred_region
      %s469 = ssub.s32 32, 32
      %470 = vsyncadd [#allocation8], %s469
      %s472 = sshll.u32 [#allocation7], 4
      %s473 = int_to_ptr.vmem [resolvable:$true] %s472
      %475 = dma.vmem_to_hbm [thread:$0]  %s473, 32, %s12, [#allocation8]
    $region53: #{tpu_custom_call.1} parent=1 // pred_fallthru
      _
    // Predicated region
    $region54: #{tpu_custom_call.1} parent=1 // pred_check
      _
    $region55: #{tpu_custom_call.1} parent=1 // pred_check_branch
      %477 = sbr.rel (0) target = $region57
    $region56: #{tpu_custom_call.1} parent=1 // pred_region
      %478 = dma.done [#allocation8], 32
    $region57: #{tpu_custom_call.1} parent=1 // pred_fallthru
      _
    %479 = vsyncpa [#allocation8], 1

</llo_original>
